<compile_context>
chip_gen: v7x
topology: tpu7x:2x2x1
jax: 0.10.0
libtpu: 0.0.40
codegen_flags: <defaults>
</compile_context>

<pallas_src>
import jax
import jax.numpy as jnp
from jax import lax
from jax.experimental import pallas as pl
from jax.experimental.pallas import tpu as pltpu

# ---- model hyper-parameters (consistent with the PyTorch module's __init__) ----
VOCAB = 50            # vocab_size
EMBED_DIM = 32        # input_dim
SEQ_LEN = 16          # length of word_seq
OUT_CHANNELS = 8      # out_channels per conv branch
KERNEL_SIZES = (3, 4, 5)
OUTPUT_DIM = 4        # output_dim
BATCH = 2

NUM_FEATS = len(KERNEL_SIZES) * OUT_CHANNELS       # 24
K_MAX = max(KERNEL_SIZES)                          # 5
L_OUT_PAD = 16                                     # per-batch conv rows, padded to sublane multiple
M_ROWS = BATCH * L_OUT_PAD                         # 32 im2col rows
W_ROWS = K_MAX * EMBED_DIM                         # 160 rows of packed conv weight

# 8-row-aligned sections of the packed parameter slab
ROW_WCONV = 0                                      # rows   0..159 : conv weights (160, 24)
ROW_BCONV = 160                                    # rows 160..167 : conv bias (1 real row)
ROW_WLIN = 168                                     # rows 168..191 : linear weight (24, 4 used)
ROW_BLIN = 192                                     # rows 192..199 : linear bias (1 real row)
PARAM_ROWS = 200

OUT_SUBLANES = 8                                   # output block (8, 128): lane-dense, sublane-full
OUT_LANES = 128


def cnn_kernel(x_ref, p_ref, out_ref):
    # x_ref:   (M_ROWS, W_ROWS)        = (32, 160)  im2col slab (built in JAX glue)
    # p_ref:   (PARAM_ROWS, NUM_FEATS) = (200, 24)  packed, 8-row-aligned parameters
    # out_ref: (8, 128)  rows [:BATCH]: lanes 0:4 = logits, lanes 4:8 = probs, rest zero
    w_conv = p_ref[ROW_WCONV:ROW_WCONV + W_ROWS, :]                 # (160, 24)
    b_conv = p_ref[ROW_BCONV:ROW_BCONV + 1, :]                      # (1, 24)
    w_lin = p_ref[ROW_WLIN:ROW_WLIN + NUM_FEATS, 0:OUTPUT_DIM]      # (24, 4)
    b_lin = p_ref[ROW_BLIN:ROW_BLIN + 1, 0:OUTPUT_DIM]              # (1, 4)

    # All three conv branches as ONE MXU matmul (taps zero-padded to K_MAX), + bias + ReLU.
    conv = jnp.dot(x_ref[...], w_conv, preferred_element_type=jnp.float32) + b_conv  # (32, 24)
    conv = jnp.maximum(conv, 0.0)

    # Mask invalid time positions (per-branch l_out and the 2 alignment-pad rows) with -inf
    # BEFORE the max-pool (ReLU outputs are >= 0, so masking to 0 would be wrong).
    t_idx = lax.broadcasted_iota(jnp.int32, (L_OUT_PAD, NUM_FEATS), 0)
    c_idx = lax.broadcasted_iota(jnp.int32, (L_OUT_PAD, NUM_FEATS), 1)
    valid_len = jnp.full((L_OUT_PAD, NUM_FEATS),
                         SEQ_LEN - KERNEL_SIZES[0] + 1, jnp.int32)
    for i in range(1, len(KERNEL_SIZES)):
        valid_len = jnp.where(c_idx >= i * OUT_CHANNELS,
                              SEQ_LEN - KERNEL_SIZES[i] + 1, valid_len)
    valid = t_idx < valid_len                                        # (16, 24)

    # max-pool over time, per batch element (slices start at rows 0 / 16 -> tile-aligned)
    feats = []
    for b in range(BATCH):                                           # static loop, BATCH tiny
        cb = conv[b * L_OUT_PAD:(b + 1) * L_OUT_PAD, :]
        cb = jnp.where(valid, cb, -jnp.inf)
        feats.append(jnp.max(cb, axis=0, keepdims=True))             # (1, 24)
    feat = jnp.concatenate(feats, axis=0)                            # (BATCH, 24)

    # Dropout is identity in eval mode; classifier.
    # NOTE(perf review): 2x24 @ 24x4 gets no MXU benefit; kept as dot — a VPU reduce
    # formulation would need a lane->sublane relayout of `feat` at this size.
    logits = jnp.dot(feat, w_lin, preferred_element_type=jnp.float32) + b_lin  # (BATCH, 4)

    # Exact softmax (exact reciprocal so probs sum to 1 for downstream consumers).
    m = jnp.max(logits, axis=1, keepdims=True)
    e = jnp.exp(logits - m)
    probs = e / jnp.sum(e, axis=1, keepdims=True)

    # One full-block zero store + two small slice stores (no lane-concat assembly).
    out_ref[...] = jnp.zeros_like(out_ref)
    out_ref[0:BATCH, 0:OUTPUT_DIM] = logits
    out_ref[0:BATCH, OUTPUT_DIM:2 * OUTPUT_DIM] = probs


def build_im2col(x_embed):
    """JAX-side glue: zero-pad time axis and unfold to the (M_ROWS, K_MAX*D) im2col slab."""
    B, L, D = x_embed.shape
    assert L >= K_MAX, "seq len must be >= max kernel size (else max-pool is over -inf)"
    # pad time so every K_MAX-shifted window of length L_OUT_PAD stays in range
    x_pad = jnp.pad(x_embed, ((0, 0), (0, L_OUT_PAD + K_MAX - 1 - L), (0, 0)))      # (B, 20, D)
    win = jnp.stack([x_pad[:, j:j + L_OUT_PAD, :] for j in range(K_MAX)], axis=2)   # (B, 16, 5, D)
    return win.reshape(B * L_OUT_PAD, K_MAX * D)                                    # (32, 160)


def text_cnn_forward(x_embed, packed_params):
    """x_embed: (B, L, D) f32 embedded word sequence. Returns (logits, probs)."""
    B, L, D = x_embed.shape
    assert B == BATCH and L == SEQ_LEN and D == EMBED_DIM

    x2d = build_im2col(x_embed)                                      # (32, 160)

    # No grid: one kernel invocation, whole-array blocks resident in VMEM.
    packed = pl.pallas_call(
        cnn_kernel,
        out_shape=jax.ShapeDtypeStruct((OUT_SUBLANES, OUT_LANES), jnp.float32),
        in_specs=[pl.BlockSpec(memory_space=pltpu.MemorySpace.VMEM),
                  pl.BlockSpec(memory_space=pltpu.MemorySpace.VMEM)],
        out_specs=pl.BlockSpec(memory_space=pltpu.MemorySpace.VMEM),
    )(x2d, packed_params)

    return packed[:B, 0:OUTPUT_DIM], packed[:B, OUTPUT_DIM:2 * OUTPUT_DIM]


def make_params(key):
    ks = jax.random.split(key, 9)
    embed_table = jax.random.normal(ks[0], (VOCAB, EMBED_DIM), jnp.float32) * 0.1
    convs = []
    for i, k in enumerate(KERNEL_SIZES):
        # conv weights stored as (k, D, C); PyTorch stores (C, 1, k, D) — same math.
        w = jax.random.normal(ks[1 + 2 * i], (k, EMBED_DIM, OUT_CHANNELS), jnp.float32) * 0.1
        b = jax.random.normal(ks[2 + 2 * i], (1, OUT_CHANNELS), jnp.float32) * 0.1
        convs.append((w, b))
    # linear stored as (3C, OUT); PyTorch stores (OUT, 3C) — same math (x @ W^T).
    wl = jax.random.normal(ks[7], (NUM_FEATS, OUTPUT_DIM), jnp.float32) * 0.1
    bl = jax.random.normal(ks[8], (1, OUTPUT_DIM), jnp.float32) * 0.1
    return embed_table, (convs, wl, bl)


def pack_params(params):
    """Pack conv/linear weights+biases into ONE (200, 24) slab with 8-row-aligned sections."""
    convs, wl, bl = params
    w_cols, b_cols = [], []
    for (w, b), k in zip(convs, KERNEL_SIZES):
        w_pad = jnp.pad(w, ((0, K_MAX - k), (0, 0), (0, 0)))                 # zero-pad taps to K_MAX
        w_cols.append(w_pad.reshape(K_MAX * EMBED_DIM, OUT_CHANNELS))        # (160, C)
        b_cols.append(b)
    w_conv = jnp.concatenate(w_cols, axis=1)                                 # rows   0..159
    b_conv = jnp.pad(jnp.concatenate(b_cols, axis=1), ((0, 7), (0, 0)))      # rows 160..167
    wl_pad = jnp.pad(wl, ((0, 0), (0, NUM_FEATS - OUTPUT_DIM)))              # rows 168..191
    bl_pad = jnp.pad(bl, ((0, 7), (0, NUM_FEATS - OUTPUT_DIM)))              # rows 192..199
    return jnp.concatenate([w_conv, b_conv, wl_pad, bl_pad], axis=0)         # (200, 24)


def reference(x_embed, params):
    """Pure-JAX reference of the same forward pass (sanity check)."""
    convs, wl, bl = params
    feats = []
    for (w, b), k in zip(convs, KERNEL_SIZES):
        B, L, D = x_embed.shape
        l_out = L - k + 1
        win = jnp.stack([x_embed[:, j:j + l_out, :] for j in range(k)], axis=2)  # (B,l_out,k,D)
        out = jnp.einsum('blkd,kdc->blc', win, w) + b
        out = jnp.maximum(out, 0.0)
        feats.append(jnp.max(out, axis=1))                                       # (B, C)
    feat = jnp.concatenate(feats, axis=1)
    logits = feat @ wl + bl
    return logits, jax.nn.softmax(logits, axis=1)


if __name__ == "__main__":
    key = jax.random.PRNGKey(0)
    k_param, k_seq = jax.random.split(key)

    embed_table, params = make_params(k_param)
    packed_params = pack_params(params)

    # word_seq: (B, L) int token ids (input to nn.Embedding)
    word_seq = jax.random.randint(k_seq, (BATCH, SEQ_LEN), 0, VOCAB, dtype=jnp.int32)

    # Embedding lookup (nn.Embedding) done in plain JAX — gather is glue here.
    x_embed = jnp.take(embed_table, word_seq, axis=0)               # (B, L, D) f32

    logits, probs = text_cnn_forward(x_embed, packed_params)
    jax.block_until_ready((logits, probs))

    ref_logits, ref_probs = reference(x_embed, params)
    assert logits.shape == (BATCH, OUTPUT_DIM) and probs.shape == (BATCH, OUTPUT_DIM)
    assert jnp.allclose(logits, ref_logits, atol=1e-5), "logits mismatch"
    assert jnp.allclose(probs, ref_probs, atol=1e-5), "probs mismatch"

    # TODO(synk): training-mode dropout not implemented; eval-mode dropout is identity.
    print("KERNEL_OK")
</pallas_src>

<mosaic_0001>
module attributes {stable_mosaic.version = 11 : i64} {
  func.func @cnn_kernel(%arg0: memref<32x160xf32, #tpu.memory_space<vmem>>, %arg1: memref<200x24xf32, #tpu.memory_space<vmem>>, %arg2: memref<8x128xf32, #tpu.memory_space<vmem>>) attributes {dimension_semantics = [], scalar_prefetch = 0 : i64, scratch_operands = 0 : i64, tpu.core_type = #tpu.core_type<tc>} {
    %c0 = arith.constant 0 : index
    %c0_0 = arith.constant 0 : index
    %0 = vector.load %arg1[%c0, %c0_0] : memref<200x24xf32, #tpu.memory_space<vmem>>, vector<160x24xf32>
    %c160 = arith.constant 160 : index
    %c0_1 = arith.constant 0 : index
    %1 = vector.load %arg1[%c160, %c0_1] : memref<200x24xf32, #tpu.memory_space<vmem>>, vector<1x24xf32>
    %c168 = arith.constant 168 : index
    %c0_2 = arith.constant 0 : index
    %2 = vector.load %arg1[%c168, %c0_2] : memref<200x24xf32, #tpu.memory_space<vmem>>, vector<24x4xf32>
    %c192 = arith.constant 192 : index
    %c0_3 = arith.constant 0 : index
    %3 = vector.load %arg1[%c192, %c0_3] : memref<200x24xf32, #tpu.memory_space<vmem>>, vector<1x4xf32>
    %c0_4 = arith.constant 0 : index
    %c0_5 = arith.constant 0 : index
    %4 = vector.load %arg0[%c0_4, %c0_5] : memref<32x160xf32, #tpu.memory_space<vmem>>, vector<32x160xf32>
    %cst = arith.constant dense<0.000000e+00> : vector<32x24xf32>
    %5 = tpu.matmul %4, %0, %cst {dimension_numbers = #tpu.dot_dimension_numbers<[1], [0], [0], [1], [0, 0, 1, 1], [], []>} : vector<32x160xf32>, vector<160x24xf32>, vector<32x24xf32> -> vector<32x24xf32>
    %6 = vector.broadcast %1 : vector<1x24xf32> to vector<32x24xf32>
    %7 = arith.addf %5, %6 : vector<32x24xf32>
    %cst_6 = arith.constant 0.000000e+00 : f32
    %8 = vector.broadcast %cst_6 : f32 to vector<32x24xf32>
    %9 = arith.maximumf %7, %8 : vector<32x24xf32>
    %10 = tpu.iota {dimensions = array<i32: 0>} : vector<16x24xi32>
    %11 = tpu.iota {dimensions = array<i32: 1>} : vector<16x24xi32>
    %c14_i32 = arith.constant 14 : i32
    %12 = vector.broadcast %c14_i32 : i32 to vector<16x24xi32>
    %c8_i32 = arith.constant 8 : i32
    %13 = vector.broadcast %c8_i32 : i32 to vector<16x24xi32>
    %14 = arith.cmpi sge, %11, %13 : vector<16x24xi32>
    %c13_i32 = arith.constant 13 : i32
    %15 = vector.broadcast %c13_i32 : i32 to vector<16x24xi32>
    %16 = arith.select %14, %15, %12 : vector<16x24xi1>, vector<16x24xi32>
    %c16_i32 = arith.constant 16 : i32
    %17 = vector.broadcast %c16_i32 : i32 to vector<16x24xi32>
    %18 = arith.cmpi sge, %11, %17 : vector<16x24xi32>
    %c12_i32 = arith.constant 12 : i32
    %19 = vector.broadcast %c12_i32 : i32 to vector<16x24xi32>
    %20 = arith.select %18, %19, %16 : vector<16x24xi1>, vector<16x24xi32>
    %21 = arith.cmpi slt, %10, %20 : vector<16x24xi32>
    %22 = vector.extract_strided_slice %9 {offsets = [0, 0], sizes = [16, 24], strides = [1, 1]} : vector<32x24xf32> to vector<16x24xf32>
    %cst_7 = arith.constant 0xFF800000 : f32
    %23 = vector.broadcast %cst_7 : f32 to vector<16x24xf32>
    %24 = arith.select %21, %22, %23 : vector<16x24xi1>, vector<16x24xf32>
    %cst_8 = arith.constant dense<0xFF800000> : vector<24xf32>
    %25 = vector.multi_reduction <maximumf>, %24, %cst_8 [0] : vector<16x24xf32> to vector<24xf32>
    %26 = vector.shape_cast %25 : vector<24xf32> to vector<1x24xf32>
    %27 = vector.extract_strided_slice %9 {offsets = [16, 0], sizes = [16, 24], strides = [1, 1]} : vector<32x24xf32> to vector<16x24xf32>
    %cst_9 = arith.constant 0xFF800000 : f32
    %28 = vector.broadcast %cst_9 : f32 to vector<16x24xf32>
    %29 = arith.select %21, %27, %28 : vector<16x24xi1>, vector<16x24xf32>
    %cst_10 = arith.constant dense<0xFF800000> : vector<24xf32>
    %30 = vector.multi_reduction <maximumf>, %29, %cst_10 [0] : vector<16x24xf32> to vector<24xf32>
    %31 = vector.shape_cast %30 : vector<24xf32> to vector<1x24xf32>
    %32 = tpu.concatenate %26, %31 in 0 : vector<1x24xf32>, vector<1x24xf32> -> vector<2x24xf32>
    %cst_11 = arith.constant dense<0.000000e+00> : vector<2x4xf32>
    %33 = tpu.matmul %32, %2, %cst_11 {dimension_numbers = #tpu.dot_dimension_numbers<[1], [0], [0], [1], [0, 0, 1, 1], [], []>} : vector<2x24xf32>, vector<24x4xf32>, vector<2x4xf32> -> vector<2x4xf32>
    %34 = vector.broadcast %3 : vector<1x4xf32> to vector<2x4xf32>
    %35 = arith.addf %33, %34 : vector<2x4xf32>
    %cst_12 = arith.constant dense<0xFF800000> : vector<2xf32>
    %36 = vector.multi_reduction <maximumf>, %35, %cst_12 [1] : vector<2x4xf32> to vector<2xf32>
    %37 = vector.shape_cast %36 : vector<2xf32> to vector<2x1xf32>
    %38 = vector.broadcast %37 : vector<2x1xf32> to vector<2x4xf32>
    %39 = arith.subf %35, %38 : vector<2x4xf32>
    %40 = math.exp %39 : vector<2x4xf32>
    %cst_13 = arith.constant dense<0.000000e+00> : vector<2xf32>
    %41 = vector.multi_reduction <add>, %40, %cst_13 [1] : vector<2x4xf32> to vector<2xf32>
    %42 = vector.shape_cast %41 : vector<2xf32> to vector<2x1xf32>
    %43 = vector.broadcast %42 : vector<2x1xf32> to vector<2x4xf32>
    %44 = arith.divf %40, %43 : vector<2x4xf32>
    %cst_14 = arith.constant 0.000000e+00 : f32
    %45 = vector.broadcast %cst_14 : f32 to vector<8x128xf32>
    %c0_15 = arith.constant 0 : index
    %c0_16 = arith.constant 0 : index
    %46 = vector.load %arg2[%c0_15, %c0_16] : memref<8x128xf32, #tpu.memory_space<vmem>>, vector<8x128xf32>
    tpu.vector_store %arg2[%c0_15, %c0_16], %45 {strides = array<i32>} : memref<8x128xf32, #tpu.memory_space<vmem>>, vector<8x128xf32>,
    %c0_17 = arith.constant 0 : index
    %c0_18 = arith.constant 0 : index
    %47 = vector.load %arg2[%c0_17, %c0_18] : memref<8x128xf32, #tpu.memory_space<vmem>>, vector<2x4xf32>
    tpu.vector_store %arg2[%c0_17, %c0_18], %35 {strides = array<i32>} : memref<8x128xf32, #tpu.memory_space<vmem>>, vector<2x4xf32>,
    %c0_19 = arith.constant 0 : index
    %c4 = arith.constant 4 : index
    %48 = vector.load %arg2[%c0_19, %c4] : memref<8x128xf32, #tpu.memory_space<vmem>>, vector<2x4xf32>
    tpu.vector_store %arg2[%c0_19, %c4], %44 {strides = array<i32>} : memref<8x128xf32, #tpu.memory_space<vmem>>, vector<2x4xf32>,
    return
  }
}

</mosaic_0001>

<llo_original>
// kernel: tpu_custom_call.1
$region0: #{tpu_custom_call.1}
  #allocation0 [shape = 'u32[]', space=smem, size = 0x4, offset = 0x4, fixed_abs, tag = 'smem constant byte address 0x4 - core index']
  #allocation1 [shape = 'u32[144,128]{1,0:T(1,128)}', space=vmem, size = 0x12000, scoped, tag = 'internal scratch']
  %s0 = inlined_call_operand.vmem [shape: f32[32,160], index: 0, kind: input, shape index: {}]
  %s1 = inlined_call_operand.vmem [shape: f32[200,24], index: 1, kind: input, shape index: {}]
  %s2 = inlined_call_operand.hbm [shape: f32[8,128], index: 2, kind: output, shape index: {}]
  %s3 = sld [smem:[#allocation0]]
  $region18: #{tpu_custom_call.1} parent=0
    _
  %s5 = ssub.s32 1, %s3
  %s6 = scalar_select 0, %s5, %s3
  $region1: #{tpu_custom_call.1} parent=0
    #allocation2 [shape = 'u8[4096]{0}', space=vmem, size = 0x1000, scoped, tag = 'output window, operand 0, single buffered']
    #allocation3 [shape = 's32[1]{0}', space=sflag, size = 0x4, scoped, tag = 'scoped memory for tpu_custom_call.1']
    %7 = vsyncpa [#allocation3], 0
    // Predicated region
    $region2: #{tpu_custom_call.1} parent=1 // pred_check
      _
    $region3: #{tpu_custom_call.1} parent=1 // pred_check_branch
      %9 = sbr.rel (0) target = $region5
    $region4: #{tpu_custom_call.1} parent=1 // pred_region
      _
    $region5: #{tpu_custom_call.1} parent=1 // pred_fallthru
      _
    // Predicated region
    $region6: #{tpu_custom_call.1} parent=1 // pred_check
      _
    $region7: #{tpu_custom_call.1} parent=1 // pred_check_branch
      %11 = sbr.rel (0) target = $region9
    $region8: #{tpu_custom_call.1} parent=1 // pred_region
      _
    $region9: #{tpu_custom_call.1} parent=1 // pred_fallthru
      _
    %v12 = vld [vmem:[%s1] sm:$0xff]
    %v13 = vld [vmem:[%s1 + $0x8] sm:$0xff]
    %v14 = vld [vmem:[%s1 + $0x10] sm:$0xff]
    %v15 = vld [vmem:[%s1 + $0x18] sm:$0xff]
    %v16 = vld [vmem:[%s1 + $0x20] sm:$0xff]
    %v17 = vld [vmem:[%s1 + $0x28] sm:$0xff]
    %v18 = vld [vmem:[%s1 + $0x30] sm:$0xff]
    %v19 = vld [vmem:[%s1 + $0x38] sm:$0xff]
    %v20 = vld [vmem:[%s1 + $0x40] sm:$0xff]
    %v21 = vld [vmem:[%s1 + $0x48] sm:$0xff]
    %v22 = vld [vmem:[%s1 + $0x50] sm:$0xff]
    %v23 = vld [vmem:[%s1 + $0x58] sm:$0xff]
    %v24 = vld [vmem:[%s1 + $0x60] sm:$0xff]
    %v25 = vld [vmem:[%s1 + $0x68] sm:$0xff]
    %v26 = vld [vmem:[%s1 + $0x70] sm:$0xff]
    %v27 = vld [vmem:[%s1 + $0x78] sm:$0xff]
    %v28 = vld [vmem:[%s1 + $0x80] sm:$0xff]
    %v29 = vld [vmem:[%s1 + $0x88] sm:$0xff]
    %v30 = vld [vmem:[%s1 + $0x90] sm:$0xff]
    %v31 = vld [vmem:[%s1 + $0x98] sm:$0xff]
    %v32 = vld [vmem:[%s1 + $0xa0] sm:$0x1]
    %v33 = vld [vmem:[%s1 + $0xa8] sm:$0xff]
    %v34 = vld [vmem:[%s1 + $0xb0] sm:$0xff]
    %v35 = vld [vmem:[%s1 + $0xb8] sm:$0xff]
    %v36 = vld [vmem:[%s1 + $0xc0] sm:$0x1]
    %v37 = vld [vmem:[%s0] sm:$0xff]
    %v38 = vld [vmem:[%s0 + $0x8] sm:$0xff]
    %v39 = vld [vmem:[%s0 + $0x10] sm:$0xff]
    %v40 = vld [vmem:[%s0 + $0x18] sm:$0xff]
    %v41 = vld [vmem:[%s0 + $0x20] sm:$0xff]
    %v42 = vld [vmem:[%s0 + $0x28] sm:$0xff]
    %v43 = vld [vmem:[%s0 + $0x30] sm:$0xff]
    %v44 = vld [vmem:[%s0 + $0x38] sm:$0xff]
    %v45 = vlaneseq
    %v46 = vshrl.u32 %v45, 7
    %v47 = vsub.s32 0, %v46
    %v48 = vrot.slane %v32, %v47
    %vm49 = vcmask 261120
    %v51 = vsel %vm49, %v38, 0
    %v54 = vsel %vm49, %v40, 0
    %v57 = vsel %vm49, %v42, 0
    %v60 = vsel %vm49, %v44, 0
    %62 = vmatprep.subr.mxu0 0.0
    %63 = vmatpush1.msra.mxu0 %v12
    %64 = vmatprep.subr.mxu0 0.0
    %65 = vmatpush1.msra.mxu0 %v13
    %66 = vmatprep.subr.mxu0 0.0
    %67 = vmatpush1.msra.mxu0 %v14
    %68 = vmatprep.subr.mxu0 0.0
    %69 = vmatpush1.msra.mxu0 %v15
    %70 = vmatprep.subr.mxu0 0.0
    %71 = vmatpush1.msra.mxu0 %v16
    %72 = vmatprep.subr.mxu0 0.0
    %73 = vmatpush1.msra.mxu0 %v17
    %74 = vmatprep.subr.mxu0 0.0
    %75 = vmatpush1.msra.mxu0 %v18
    %76 = vmatprep.subr.mxu0 0.0
    %77 = vmatpush1.msra.mxu0 %v19
    %78 = vmatprep.subr.mxu0 0.0
    %79 = vmatpush1.msra.mxu0 %v20
    %80 = vmatprep.subr.mxu0 0.0
    %81 = vmatpush1.msra.mxu0 %v21
    %82 = vmatprep.subr.mxu0 0.0
    %83 = vmatpush1.msra.mxu0 %v22
    %84 = vmatprep.subr.mxu0 0.0
    %85 = vmatpush1.msra.mxu0 %v23
    %86 = vmatprep.subr.mxu0 0.0
    %87 = vmatpush1.msra.mxu0 %v24
    %88 = vmatprep.subr.mxu0 0.0
    %89 = vmatpush1.msra.mxu0 %v25
    %90 = vmatprep.subr.mxu0 0.0
    %91 = vmatpush1.msra.mxu0 %v26
    %92 = vmatprep.subr.mxu0 0.0
    %93 = vmatpush1.msra.mxu0 %v27
    %94 = vmatprep.subr.mxu0 0.0
    %95 = vmatpush1.msra.mxu0 %v28
    %96 = vmatprep.subr.mxu0 0.0
    %97 = vmatpush1.msra.mxu0 %v29
    %98 = vmatprep.subr.mxu0 0.0
    %99 = vmatpush1.msra.mxu0 %v30
    %100 = vmatprep.subr.mxu0 0.0
    %101 = vmatpush1.msra.mxu0 %v31
    %102 = vmatprep.subr.mxu0 0.0
    %103 = vmatpush1.msra.mxu0 0.0
    %104 = vmatprep.subr.mxu0 0.0
    %105 = vmatpush1.msra.mxu0 0.0
    %106 = vmatprep.subr.mxu0 0.0
    %107 = vmatpush1.msra.mxu0 0.0
    %108 = vmatprep.subr.mxu0 0.0
    %109 = vmatpush1.msra.mxu0 0.0
    %110 = vmatprep.subr.mxu0 0.0
    %111 = vmatpush1.msra.mxu0 0.0
    %112 = vmatprep.subr.mxu0 0.0
    %113 = vmatpush1.msra.mxu0 0.0
    %114 = vmatprep.subr.mxu0 0.0
    %115 = vmatpush1.msra.mxu0 0.0
    %116 = vmatprep.subr.mxu0 0.0
    %117 = vmatpush1.msra.mxu0 0.0
    %118 = vmatprep.subr.mxu0 0.0
    %119 = vmatpush1.msra.mxu0 0.0
    %120 = vmatprep.subr.mxu0 0.0
    %121 = vmatpush1.msra.mxu0 0.0
    %122 = vmatprep.subr.mxu0 0.0
    %123 = vmatpush1.msra.mxu0 0.0
    %124 = vmatprep.subr.mxu0 0.0
    %125 = vmatpush1.msra.mxu0 0.0
    %126 = vmatprep.mubr.f32.mxu0 %v51
    %127 = vmatmul.mubr.f32.gmra.mrb[0].mxu0 %v37
    %v128 = vpop.f32.mrb[0].mxu0
    %v129 = vadd.f32 %v48, %v128
    %v130 = vpop.f32.mrb[0].mxu0
    %131 = vmatprep.mubr.f32.mxu0 %v54
    %132 = vmatmul.mubr.f32.gmra.mrb[0].mxu0 %v39
    %v133 = vpop.f32.mrb[0].mxu0
    %v134 = vadd.f32 %v48, %v133
    %v135 = vpop.f32.mrb[0].mxu0
    %136 = vmatprep.mubr.f32.mxu0 %v57
    %137 = vmatmul.mubr.f32.gmra.mrb[0].mxu0 %v41
    %v138 = vpop.f32.mrb[0].mxu0
    %v139 = vadd.f32 %v48, %v138
    %v140 = vpop.f32.mrb[0].mxu0
    %141 = vmatprep.mubr.f32.mxu0 %v60
    %142 = vmatmul.mubr.f32.gmra.mrb[0].mxu0 %v43
    %v143 = vpop.f32.mrb[0].mxu0
    %v144 = vadd.f32 %v48, %v143
    %v145 = vpop.f32.mrb[0].mxu0
    %146 = vdwg.mxu0
    %v147 = vmax.f32 %v129, 0.0
    %v148 = vmax.f32 %v134, 0.0
    %v149 = vmax.f32 %v139, 0.0
    %v150 = vmax.f32 %v144, 0.0
    %v151 = vlaneseq
    %v152 = vshrl.u32 %v151, 7
    %v153 = vadd.s32 %v152, 8
    %v154 = vlaneseq
    %v155 = vand.u32 %v154, 127
    %vm156 = vcmp.ge.s32.totalorder %v155, 8
    %v157 = vsel %vm156, 13, 14
    %vm158 = vcmp.ge.s32.totalorder %v155, 16
    %v159 = vsel %vm158, 12, %v157
    %vm160 = vcmp.lt.s32.totalorder %v152, %v159
    %vm161 = vcmp.lt.s32.totalorder %v153, %v159
    %v162 = vsel %vm160, %v147, -inf
    %v163 = vsel %vm161, %v148, -inf
    %vm164 = vcmask 195584
    %v165 = vsel %vm164, %v162, -inf
    %v166 = vsel %vm164, %v163, -inf
    %v167 = vmax.f32 %v165, %v166
    %v168 = vrot.slane %v167, 4
    %v169 = vmax.f32 %v167, %v168
    %v170 = vrot.slane %v169, 2
    %v171 = vmax.f32 %v169, %v170
    %v172 = vrot.slane %v171, 1
    %v173 = vmax.f32 %v171, %v172
    %v174 = vsel %vm160, %v149, -inf
    %v175 = vsel %vm161, %v150, -inf
    %v176 = vsel %vm164, %v174, -inf
    %v177 = vsel %vm164, %v175, -inf
    %v178 = vmax.f32 %v176, %v177
    %v179 = vrot.slane %v178, 4
    %v180 = vmax.f32 %v178, %v179
    %v181 = vrot.slane %v180, 2
    %v182 = vmax.f32 %v180, %v181
    %v183 = vrot.slane %v182, 1
    %v184 = vmax.f32 %v182, %v183
    %vm185 = vcmask 1040384
    %v186 = vsel %vm185, %v173, %v184
    %v187 = vlaneseq
    %v188 = vshrl.u32 %v187, 7
    %v189 = vsub.s32 0, %v188
    %v190 = vrot.slane %v36, %v189
    %v192 = vsel %vm164, %v186, 0
    %194 = vmatprep.subr.mxu0 0.0
    %195 = vmatpush1.msra.mxu0 %v33
    %196 = vmatprep.subr.mxu0 0.0
    %197 = vmatpush1.msra.mxu0 %v34
    %198 = vmatprep.subr.mxu0 0.0
    %199 = vmatpush1.msra.mxu0 %v35
    %200 = vmatprep.subr.mxu0 0.0
    %201 = vmatpush1.msra.mxu0 0.0
    %202 = vmatprep.subr.mxu0 0.0
    %203 = vmatpush1.msra.mxu0 0.0
    %204 = vmatprep.subr.mxu0 0.0
    %205 = vmatpush1.msra.mxu0 0.0
    %206 = vmatprep.subr.mxu0 0.0
    %207 = vmatpush1.msra.mxu0 0.0
    %208 = vmatprep.subr.mxu0 0.0
    %209 = vmatpush1.msra.mxu0 0.0
    %210 = vmatprep.subr.mxu0 0.0
    %211 = vmatpush1.msra.mxu0 0.0
    %212 = vmatprep.subr.mxu0 0.0
    %213 = vmatpush1.msra.mxu0 0.0
    %214 = vmatprep.subr.mxu0 0.0
    %215 = vmatpush1.msra.mxu0 0.0
    %216 = vmatprep.subr.mxu0 0.0
    %217 = vmatpush1.msra.mxu0 0.0
    %218 = vmatprep.subr.mxu0 0.0
    %219 = vmatpush1.msra.mxu0 0.0
    %220 = vmatprep.subr.mxu0 0.0
    %221 = vmatpush1.msra.mxu0 0.0
    %222 = vmatprep.subr.mxu0 0.0
    %223 = vmatpush1.msra.mxu0 0.0
    %224 = vmatprep.subr.mxu0 0.0
    %225 = vmatpush1.msra.mxu0 0.0
    %226 = vmatprep.subr.mxu0 0.0
    %227 = vmatpush1.msra.mxu0 0.0
    %228 = vmatprep.subr.mxu0 0.0
    %229 = vmatpush1.msra.mxu0 0.0
    %230 = vmatprep.subr.mxu0 0.0
    %231 = vmatpush1.msra.mxu0 0.0
    %232 = vmatprep.subr.mxu0 0.0
    %233 = vmatpush1.msra.mxu0 0.0
    %234 = vmatprep.subr.mxu0 0.0
    %235 = vmatpush1.msra.mxu0 0.0
    %236 = vmatprep.subr.mxu0 0.0
    %237 = vmatpush1.msra.mxu0 0.0
    %238 = vmatprep.subr.mxu0 0.0
    %239 = vmatpush1.msra.mxu0 0.0
    %240 = vmatprep.subr.mxu0 0.0
    %241 = vmatpush1.msra.mxu0 0.0
    %242 = vmatprep.subr.mxu0 0.0
    %243 = vmatpush1.msra.mxu0 0.0
    %244 = vmatprep.subr.mxu0 0.0
    %245 = vmatpush1.msra.mxu0 0.0
    %246 = vmatprep.subr.mxu0 0.0
    %247 = vmatpush1.msra.mxu0 0.0
    %248 = vmatprep.subr.mxu0 0.0
    %249 = vmatpush1.msra.mxu0 0.0
    %250 = vmatprep.subr.mxu0 0.0
    %251 = vmatpush1.msra.mxu0 0.0
    %252 = vmatprep.subr.mxu0 0.0
    %253 = vmatpush1.msra.mxu0 0.0
    %254 = vmatprep.subr.mxu0 0.0
    %255 = vmatpush1.msra.mxu0 0.0
    %256 = vmatprep.subr.mxu0 0.0
    %257 = vmatpush1.msra.mxu0 0.0
    %258 = vmatprep.mubr.f32.mxu0 0.0
    %259 = vmatmul.mubr.f32.gmra.mrb[0].mxu0 %v192
    %v260 = vpop.f32.mrb[0].mxu0
    %v261 = vadd.f32 %v190, %v260
    %v262 = vpop.f32.mrb[0].mxu0
    %263 = vdwg.mxu0
    %vm264 = vcmask 25600
    %v265 = vsel %vm264, %v261, -inf
    %266 = vmax.xlane.f32.xlu0 %v265
    %v267 = vpop.xlane.xlu0 %266
    %v268 = vsub.f32 %v261, %v267
    %v269 = vmul.f32 %v268, 1.442695
    %v270 = vpow.pop %v269
    %v271 = vsel %vm264, %v270, 0.0
    %272 = vadd.xlane.f32.xlu0 %v271
    %v273 = vpop.xlane.xlu0 %272
    %v274 = vrcp.pop %v273
    %v275 = vmul.f32 %v270, %v274
    %276 = vst [vmem:[#allocation2] sm:$0xff] 0.0
    %277 = vst.msk [vmem:[#allocation2] sm:$0x3] %vm264, %v261
    %279 = vrot.lane.b32.xlu0 %v275, 4
    %v280 = vpop.permute.xlu0 %279
    %vm282 = vcmask 58400
    %283 = vst.msk [vmem:[#allocation2] sm:$0x3] %vm282, %v280
    // Predicated region
    $region10: #{tpu_custom_call.1} parent=1 // pred_check
      _
    $region11: #{tpu_custom_call.1} parent=1 // pred_check_branch
      %285 = sbr.rel (0) target = $region13
    $region12: #{tpu_custom_call.1} parent=1 // pred_region
      %s287 = ssub.s32 128, 128
      %288 = vsyncadd [#allocation3], %s287
      %s290 = sshll.u32 [#allocation2], 4
      %s291 = int_to_ptr.vmem [resolvable:$true] %s290
      %293 = dma.vmem_to_hbm [thread:$0]  %s291, 128, %s2, [#allocation3]
    $region13: #{tpu_custom_call.1} parent=1 // pred_fallthru
      _
    // Predicated region
    $region14: #{tpu_custom_call.1} parent=1 // pred_check
      _
    $region15: #{tpu_custom_call.1} parent=1 // pred_check_branch
      %295 = sbr.rel (0) target = $region17
    $region16: #{tpu_custom_call.1} parent=1 // pred_region
      %296 = dma.done [#allocation3], 128
    $region17: #{tpu_custom_call.1} parent=1 // pred_fallthru
      _
    %297 = vsyncpa [#allocation3], 1

</llo_original>
